<compile_context>
chip_gen: v5e
topology: v5e:2x2
jax: 0.10.0
libtpu: 0.0.40
codegen_flags: <defaults>
</compile_context>

<pallas_src>
import functools

import numpy as np
import jax
import jax.numpy as jnp
from jax.experimental import pallas as pl
from jax.experimental.pallas import tpu as pltpu


# Per block-buffer VMEM budget.  Accounting: 2x double-buffered input block +
# 2x double-buffered output block (= 4 budgets) + ~6 live tile-sized f32
# temporaries inside the step body (carry, du_l, acc, 2 wraps, select) ->
# ~10-12 budgets ~= 20-24 MiB, comfortably below the 32 MiB scoped default.
_TILE_VMEM_BUDGET_BYTES = 2 * 1024 * 1024
_VMEM_LIMIT_BYTES = 32 * 1024 * 1024           # safe on v5e / v6e / v7x


def _pick_tile_m(m_pad, nconp, l_pad):
    """Batch tile: multiple of 8 dividing m_pad, within the VMEM budget, and
    small enough that the grid has >= 2 blocks when m_pad >= 16 (v7x megacore)."""
    row_bytes = nconp * l_pad * 4
    cap = max(8, (_TILE_VMEM_BUDGET_BYTES // row_bytes) // 8 * 8)
    if m_pad >= 16:
        cap = min(cap, max(8, (m_pad // 2) // 8 * 8))
    tm = min(m_pad, cap)
    tm -= tm % 8
    tm = max(tm, 8)
    while m_pad % tm != 0:             # keep the grid exact (no partial blocks)
        tm -= 8
    return tm


def _roe_coefficients(dx, nconp):
    # Constant characteristic decomposition (conp = hide = 1 linearization of
    # the ODEnet cal_lam / cal_L outputs): Lam = 1, L = I, R = inv(L) = I.
    L = np.eye(nconp, dtype=np.float64)
    R = np.linalg.inv(L)
    Lam = np.ones((nconp,), dtype=np.float64)
    a_minus = np.einsum("i,ki,ij->kj", Lam - np.abs(Lam), R, L)
    a_plus = np.einsum("i,ki,ij->kj", Lam + np.abs(Lam), R, L)
    inv_2dx = 1.0 / (2.0 * dx)
    # Fold the sign and 1/(2*dx) into the coefficients at trace time.
    coef_minus = tuple(tuple(float(-v * inv_2dx) for v in row) for row in a_minus)
    coef_plus = tuple(tuple(float(-v * inv_2dx) for v in row) for row in a_plus)
    return coef_minus, coef_plus


def _odenet_fused_kernel(u_ref, o_ref, *, coef_minus, coef_plus, n_steps,
                         l_logical, igst, nconp):
    """Runs all n_steps Euler updates on one VMEM-resident batch tile.

    u_ref, o_ref: (nconp, tile_m, l_pad) float32 VMEM blocks (batch on
    sublanes, grid on lanes).  coef_minus / coef_plus already carry
    -h/(2*dx); exact zeros are pruned at trace time, coefficients equal to
    1.0 skip the multiply.
    """
    _, tm, l_pad = u_ref.shape
    grid_n = l_logical - 2 * igst              # interior length = wrap distance

    need_r = any(c != 0.0 for row in coef_minus for c in row)   # du_r = ur - u
    need_l = any(c != 0.0 for row in coef_plus for c in row)    # du_l = u - ul

    # Per-lane masks built once as a single (1, l_pad) row; jnp.where broadcasts
    # over the sublane (batch) axis -> no tile-sized int32 temporaries.
    lane = jax.lax.broadcasted_iota(jnp.int32, (1, l_pad), 1)
    is_left = lane == 0
    is_right = lane == (l_logical - 1)                 # logical length, not l_pad
    in_lghost = lane < igst
    in_rghost = lane >= (l_logical - igst)

    u = tuple(u_ref[j, :, :] for j in range(nconp))

    def euler_step(u):
        du_l = {}
        du_r = {}
        for j in range(nconp):
            need_j_l = need_l and any(coef_plus[k][j] != 0.0 for k in range(nconp))
            need_j_r = need_r and any(coef_minus[k][j] != 0.0 for k in range(nconp))
            if not (need_j_l or need_j_r):
                continue
            uj = u[j]
            if need_j_l:
                # ul: replicate-pad left neighbour (rotate right by 1, fix col 0).
                ul_j = jnp.where(is_left, uj, pltpu.roll(uj, shift=1, axis=1))
                du_l[j] = uj - ul_j
            if need_j_r:
                # ur: replicate-pad right neighbour (rotate left by 1 written as a
                # non-negative shift, fix the last *logical* column).
                ur_j = jnp.where(is_right, uj,
                                 pltpu.roll(uj, shift=l_pad - 1, axis=1))
                du_r[j] = ur_j - uj

        new_u = []
        for k in range(nconp):
            acc = u[k]                          # builds z + h*du directly (axpy fused)
            for j in range(nconp):
                cm = coef_minus[k][j]
                if cm != 0.0:
                    acc = acc + (du_r[j] if cm == 1.0 else cm * du_r[j])
                cp = coef_plus[k][j]
                if cp != 0.0:
                    acc = acc + (du_l[j] if cp == 1.0 else cp * du_l[j])
            # cal_boundry: periodic ghost-cell copy, in-VMEM.
            #   new[0:igst]   = acc[grid_n : grid_n + igst]
            #   new[L-igst:L] = acc[igst : 2*igst]
            # expressed as two XLU lane rolls + selects (roll(x, s)[j] = x[j - s]).
            lwrap = pltpu.roll(acc, shift=l_pad - grid_n, axis=1)
            rwrap = pltpu.roll(acc, shift=grid_n, axis=1)
            acc = jnp.where(in_lghost, lwrap, jnp.where(in_rghost, rwrap, acc))
            new_u.append(acc)
        return tuple(new_u)

    if n_steps <= 8:
        # Short fixed trip count: unroll statically (full scheduler visibility).
        for _ in range(n_steps):
            u = euler_step(u)
    else:
        u = jax.lax.fori_loop(0, n_steps, lambda _, s: euler_step(s), u)

    for k in range(nconp):
        o_ref[k, :, :] = u[k].astype(o_ref.dtype)


def make_odenet_forward(dx, igst, eps, nconp):
    """Returns forward(z0, t1_t0) matching ODEnet.forward (constant lam/L)."""
    coef_minus0, coef_plus0 = _roe_coefficients(dx, nconp)

    def forward(z0, t1_t0):
        m, n, l = z0.shape
        assert n == nconp
        n_steps = int(round(t1_t0 / eps))
        if n_steps <= 0:
            return z0.astype(jnp.float32)
        h = t1_t0 / n_steps

        # Fold the Euler step size h into the flux coefficients at trace time.
        coef_minus = tuple(tuple(float(c * h) for c in row) for row in coef_minus0)
        coef_plus = tuple(tuple(float(c * h) for c in row) for row in coef_plus0)

        l_pad = ((l + 127) // 128) * 128
        m_pad = ((m + 7) // 8) * 8

        # [M, N, L] -> [N, M, L] once per forward call (not per Euler step):
        # batch on sublanes, spatial grid on lanes.  Cheap zero-pad: padded lanes
        # are masked in-kernel, padded batch rows are sliced off on output.
        ut = jnp.transpose(z0.astype(jnp.float32), (1, 0, 2))
        if m_pad != m or l_pad != l:
            ut = jnp.pad(ut, ((0, 0), (0, m_pad - m), (0, l_pad - l)))

        tm = _pick_tile_m(m_pad, nconp, l_pad)
        grid = (m_pad // tm,)

        kern = functools.partial(
            _odenet_fused_kernel,
            coef_minus=coef_minus,
            coef_plus=coef_plus,
            n_steps=n_steps,
            l_logical=l,
            igst=igst,
            nconp=nconp,
        )

        elems = m_pad * nconp * l_pad
        out_t = pl.pallas_call(
            kern,
            out_shape=jax.ShapeDtypeStruct((nconp, m_pad, l_pad), jnp.float32),
            grid=grid,
            in_specs=[pl.BlockSpec((nconp, tm, l_pad), lambda i: (0, i, 0))],
            out_specs=pl.BlockSpec((nconp, tm, l_pad), lambda i: (0, i, 0)),
            compiler_params=pltpu.CompilerParams(
                dimension_semantics=("parallel",),
                vmem_limit_bytes=_VMEM_LIMIT_BYTES),
            cost_estimate=pl.CostEstimate(
                flops=10 * n_steps * elems,
                transcendentals=0,
                bytes_accessed=2 * elems * 4),
        )(ut)

        # Back to the PyTorch layout; drop batch + lane padding.
        return jnp.transpose(out_t[:, :m, :l], (1, 0, 2))

    return forward


# ----------------------------------------------------------------------------
# Pure-JAX reference (mirrors ODEnet.forward with the same constant lam/L)
# ----------------------------------------------------------------------------
def cal_du_ref(u, dx, nconp):
    ul = jnp.concatenate([u[:, :, :1], u[:, :, :-1]], axis=2)
    ur = jnp.concatenate([u[:, :, 1:], u[:, :, -1:]], axis=2)
    L = np.eye(nconp, dtype=np.float32)
    R = np.linalg.inv(L).astype(np.float32)
    Lam = np.ones((nconp,), np.float32)
    Am = jnp.asarray(np.einsum("i,ki,ij->kj", Lam - np.abs(Lam), R, L))
    Ap = jnp.asarray(np.einsum("i,ki,ij->kj", Lam + np.abs(Lam), R, L))
    Rur = jnp.einsum("kj,mjl->mkl", Am, ur - u)
    Rul = jnp.einsum("kj,mjl->mkl", Ap, u - ul)
    return -(Rur + Rul) / (2.0 * dx)


def cal_boundry_ref(u, igst):
    return jnp.concatenate(
        (u[:, :, -2 * igst:-igst], u[:, :, igst:-igst], u[:, :, igst:2 * igst]),
        axis=2)


def odenet_forward_ref(z0, t1_t0, eps, dx, nconp, igst):
    n_steps = int(round(t1_t0 / eps))
    h = t1_t0 / n_steps
    z = z0.astype(jnp.float32)
    for _ in range(n_steps):
        z = cal_boundry_ref(z + h * cal_du_ref(z, dx, nconp), igst)
    return z


if __name__ == "__main__":
    # Module defaults: conp = 1, grid_size = 100, igst = 10, dx = 1/100.
    nconp = 1
    igst_ = 10
    grid_size_ = 100
    xe_, xs_ = 0.5, -0.5
    dx_ = (xe_ - xs_) / grid_size_
    eps_ = 1e-3
    t1_t0 = 4e-3                        # -> 4 fused Euler steps

    batch = 16
    total_l = grid_size_ + 2 * igst_    # 120 points incl. ghost cells (lane-pad to 128)

    key = jax.random.PRNGKey(0)
    z0 = jax.random.normal(key, (batch, nconp, total_l), dtype=jnp.float32)

    forward = make_odenet_forward(dx_, igst_, eps_, nconp)

    # Full ODEnet forward: one pallas_call runs all Euler steps + boundary updates.
    zf = jax.block_until_ready(forward(z0, t1_t0))
    zr = jax.block_until_ready(odenet_forward_ref(z0, t1_t0, eps_, dx_, nconp, igst_))
    np.testing.assert_allclose(np.asarray(zf), np.asarray(zr), rtol=1e-4, atol=1e-5)

    # Ragged batch (exercises the M-pad path; tile size stays bounded / VMEM-safe).
    z0b = jax.random.normal(jax.random.PRNGKey(0), (6, nconp, total_l),
                            dtype=jnp.float32)
    zfb = jax.block_until_ready(forward(z0b, t1_t0))
    zrb = jax.block_until_ready(odenet_forward_ref(z0b, t1_t0, eps_, dx_, nconp, igst_))
    np.testing.assert_allclose(np.asarray(zfb), np.asarray(zrb), rtol=1e-4, atol=1e-5)

    print("KERNEL_OK")
</pallas_src>

<mosaic_0001>
module attributes {stable_mosaic.version = 11 : i64} {
  func.func @_odenet_fused_kernel(%arg0: i32, %arg1: memref<1x8x128xf32, #tpu.memory_space<vmem>>, %arg2: memref<1x8x128xf32, #tpu.memory_space<vmem>>) attributes {dimension_semantics = [#tpu.dimension_semantics<parallel>], iteration_bounds = array<i64: 2>, scalar_prefetch = 0 : i64, scratch_operands = 0 : i64, tpu.core_type = #tpu.core_type<tc>, window_params = [{transform_indices = @transform_0, window_bounds = array<i64: 1, 8, 128>}, {transform_indices = @transform_1, window_bounds = array<i64: 1, 8, 128>}]} {
    %0 = tpu.iota {dimensions = array<i32: 1>} : vector<1x128xi32>
    %c0_i32 = arith.constant 0 : i32
    %1 = vector.broadcast %c0_i32 : i32 to vector<1x128xi32>
    %2 = arith.cmpi eq, %0, %1 : vector<1x128xi32>
    %c10_i32 = arith.constant 10 : i32
    %3 = vector.broadcast %c10_i32 : i32 to vector<1x128xi32>
    %4 = arith.cmpi slt, %0, %3 : vector<1x128xi32>
    %c110_i32 = arith.constant 110 : i32
    %5 = vector.broadcast %c110_i32 : i32 to vector<1x128xi32>
    %6 = arith.cmpi sge, %0, %5 : vector<1x128xi32>
    %c0 = arith.constant 0 : index
    %c0_0 = arith.constant 0 : index
    %c0_1 = arith.constant 0 : index
    %7 = vector.load %arg1[%c0, %c0_0, %c0_1] : memref<1x8x128xf32, #tpu.memory_space<vmem>>, vector<1x8x128xf32>
    %8 = vector.shape_cast %7 : vector<1x8x128xf32> to vector<8x128xf32>
    %c1_i32 = arith.constant 1 : i32
    %9 = tpu.dynamic_rotate %8 by %c1_i32 dim 1 : vector<8x128xf32>, i32 -> vector<8x128xf32>
    %10 = vector.shape_cast %2 : vector<1x128xi1> to vector<1x128xi1>
    %11 = vector.broadcast %10 : vector<1x128xi1> to vector<8x128xi1>
    %12 = arith.select %11, %8, %9 : vector<8x128xi1>, vector<8x128xf32>
    %13 = arith.subf %8, %12 : vector<8x128xf32>
    %cst = arith.constant -1.000000e-01 : f32
    %14 = vector.broadcast %cst : f32 to vector<8x128xf32>
    %15 = arith.mulf %14, %13 : vector<8x128xf32>
    %16 = arith.addf %8, %15 : vector<8x128xf32>
    %c28_i32 = arith.constant 28 : i32
    %17 = tpu.dynamic_rotate %16 by %c28_i32 dim 1 : vector<8x128xf32>, i32 -> vector<8x128xf32>
    %c100_i32 = arith.constant 100 : i32
    %18 = tpu.dynamic_rotate %16 by %c100_i32 dim 1 : vector<8x128xf32>, i32 -> vector<8x128xf32>
    %19 = vector.shape_cast %6 : vector<1x128xi1> to vector<1x128xi1>
    %20 = vector.broadcast %19 : vector<1x128xi1> to vector<8x128xi1>
    %21 = arith.select %20, %18, %16 : vector<8x128xi1>, vector<8x128xf32>
    %22 = vector.shape_cast %4 : vector<1x128xi1> to vector<1x128xi1>
    %23 = vector.broadcast %22 : vector<1x128xi1> to vector<8x128xi1>
    %24 = arith.select %23, %17, %21 : vector<8x128xi1>, vector<8x128xf32>
    %c1_i32_2 = arith.constant 1 : i32
    %25 = tpu.dynamic_rotate %24 by %c1_i32_2 dim 1 : vector<8x128xf32>, i32 -> vector<8x128xf32>
    %26 = vector.shape_cast %2 : vector<1x128xi1> to vector<1x128xi1>
    %27 = vector.broadcast %26 : vector<1x128xi1> to vector<8x128xi1>
    %28 = arith.select %27, %24, %25 : vector<8x128xi1>, vector<8x128xf32>
    %29 = arith.subf %24, %28 : vector<8x128xf32>
    %cst_3 = arith.constant -1.000000e-01 : f32
    %30 = vector.broadcast %cst_3 : f32 to vector<8x128xf32>
    %31 = arith.mulf %30, %29 : vector<8x128xf32>
    %32 = arith.addf %24, %31 : vector<8x128xf32>
    %c28_i32_4 = arith.constant 28 : i32
    %33 = tpu.dynamic_rotate %32 by %c28_i32_4 dim 1 : vector<8x128xf32>, i32 -> vector<8x128xf32>
    %c100_i32_5 = arith.constant 100 : i32
    %34 = tpu.dynamic_rotate %32 by %c100_i32_5 dim 1 : vector<8x128xf32>, i32 -> vector<8x128xf32>
    %35 = vector.shape_cast %6 : vector<1x128xi1> to vector<1x128xi1>
    %36 = vector.broadcast %35 : vector<1x128xi1> to vector<8x128xi1>
    %37 = arith.select %36, %34, %32 : vector<8x128xi1>, vector<8x128xf32>
    %38 = vector.shape_cast %4 : vector<1x128xi1> to vector<1x128xi1>
    %39 = vector.broadcast %38 : vector<1x128xi1> to vector<8x128xi1>
    %40 = arith.select %39, %33, %37 : vector<8x128xi1>, vector<8x128xf32>
    %c1_i32_6 = arith.constant 1 : i32
    %41 = tpu.dynamic_rotate %40 by %c1_i32_6 dim 1 : vector<8x128xf32>, i32 -> vector<8x128xf32>
    %42 = vector.shape_cast %2 : vector<1x128xi1> to vector<1x128xi1>
    %43 = vector.broadcast %42 : vector<1x128xi1> to vector<8x128xi1>
    %44 = arith.select %43, %40, %41 : vector<8x128xi1>, vector<8x128xf32>
    %45 = arith.subf %40, %44 : vector<8x128xf32>
    %cst_7 = arith.constant -1.000000e-01 : f32
    %46 = vector.broadcast %cst_7 : f32 to vector<8x128xf32>
    %47 = arith.mulf %46, %45 : vector<8x128xf32>
    %48 = arith.addf %40, %47 : vector<8x128xf32>
    %c28_i32_8 = arith.constant 28 : i32
    %49 = tpu.dynamic_rotate %48 by %c28_i32_8 dim 1 : vector<8x128xf32>, i32 -> vector<8x128xf32>
    %c100_i32_9 = arith.constant 100 : i32
    %50 = tpu.dynamic_rotate %48 by %c100_i32_9 dim 1 : vector<8x128xf32>, i32 -> vector<8x128xf32>
    %51 = vector.shape_cast %6 : vector<1x128xi1> to vector<1x128xi1>
    %52 = vector.broadcast %51 : vector<1x128xi1> to vector<8x128xi1>
    %53 = arith.select %52, %50, %48 : vector<8x128xi1>, vector<8x128xf32>
    %54 = vector.shape_cast %4 : vector<1x128xi1> to vector<1x128xi1>
    %55 = vector.broadcast %54 : vector<1x128xi1> to vector<8x128xi1>
    %56 = arith.select %55, %49, %53 : vector<8x128xi1>, vector<8x128xf32>
    %c1_i32_10 = arith.constant 1 : i32
    %57 = tpu.dynamic_rotate %56 by %c1_i32_10 dim 1 : vector<8x128xf32>, i32 -> vector<8x128xf32>
    %58 = vector.shape_cast %2 : vector<1x128xi1> to vector<1x128xi1>
    %59 = vector.broadcast %58 : vector<1x128xi1> to vector<8x128xi1>
    %60 = arith.select %59, %56, %57 : vector<8x128xi1>, vector<8x128xf32>
    %61 = arith.subf %56, %60 : vector<8x128xf32>
    %cst_11 = arith.constant -1.000000e-01 : f32
    %62 = vector.broadcast %cst_11 : f32 to vector<8x128xf32>
    %63 = arith.mulf %62, %61 : vector<8x128xf32>
    %64 = arith.addf %56, %63 : vector<8x128xf32>
    %c28_i32_12 = arith.constant 28 : i32
    %65 = tpu.dynamic_rotate %64 by %c28_i32_12 dim 1 : vector<8x128xf32>, i32 -> vector<8x128xf32>
    %c100_i32_13 = arith.constant 100 : i32
    %66 = tpu.dynamic_rotate %64 by %c100_i32_13 dim 1 : vector<8x128xf32>, i32 -> vector<8x128xf32>
    %67 = vector.shape_cast %6 : vector<1x128xi1> to vector<1x128xi1>
    %68 = vector.broadcast %67 : vector<1x128xi1> to vector<8x128xi1>
    %69 = arith.select %68, %66, %64 : vector<8x128xi1>, vector<8x128xf32>
    %70 = vector.shape_cast %4 : vector<1x128xi1> to vector<1x128xi1>
    %71 = vector.broadcast %70 : vector<1x128xi1> to vector<8x128xi1>
    %72 = arith.select %71, %65, %69 : vector<8x128xi1>, vector<8x128xf32>
    %c0_14 = arith.constant 0 : index
    %c0_15 = arith.constant 0 : index
    %c0_16 = arith.constant 0 : index
    %73 = vector.load %arg2[%c0_14, %c0_15, %c0_16] : memref<1x8x128xf32, #tpu.memory_space<vmem>>, vector<1x8x128xf32>
    %74 = vector.shape_cast %73 : vector<1x8x128xf32> to vector<8x128xf32>
    %75 = vector.shape_cast %72 : vector<8x128xf32> to vector<1x8x128xf32>
    tpu.vector_store %arg2[%c0_14, %c0_15, %c0_16], %75 {strides = array<i32>} : memref<1x8x128xf32, #tpu.memory_space<vmem>>, vector<1x8x128xf32>,
    return
  }
  func.func @transform_0(%arg0: i32) -> (i32, i32, i32) {
    %c0_i32 = arith.constant 0 : i32
    %c0_i32_0 = arith.constant 0 : i32
    %c0_i32_1 = arith.constant 0 : i32
    return %c0_i32, %arg0, %c0_i32_0 : i32, i32, i32
  }
  func.func @transform_1(%arg0: i32) -> (i32, i32, i32) {
    %c0_i32 = arith.constant 0 : i32
    %c0_i32_0 = arith.constant 0 : i32
    %c0_i32_1 = arith.constant 0 : i32
    return %c0_i32, %arg0, %c0_i32_0 : i32, i32, i32
  }
}

</mosaic_0001>

<llo_original>
// kernel: tpu_custom_call.1
$region0: #{tpu_custom_call.1}
  #allocation0 [shape = 'u32[]', space=smem, size = 0x4, offset = 0x4, fixed_abs, tag = 'smem constant byte address 0x4 - core index']
  #allocation1 [shape = 'u32[72,128]{1,0:T(1,128)}', space=vmem, size = 0x9000, scoped, tag = 'internal scratch']
  %s0 = inlined_call_operand.hbm [shape: f32[1,16,128], index: 0, kind: input, shape index: {}]
  %s1 = inlined_call_operand.hbm [shape: f32[1,16,128], index: 1, kind: output, shape index: {}]
  %s2 = sld [smem:[#allocation0]]
  $region41: #{tpu_custom_call.1} parent=0
    _
  %s4 = ssub.s32 1, %s2
  %s5 = scalar_select 0, %s4, %s2
  $region1: #{tpu_custom_call.1} parent=0
    #allocation2 [shape = 'u8[8192]{0}', space=vmem, size = 0x2000, scoped, tag = 'input window, operand 0']
    #allocation3 [shape = 's32[2]{0}', space=sflag, size = 0x8, scoped, tag = 'scoped memory for tpu_custom_call.1']
    #allocation4 [shape = 's32[2]{0}', space=sflag, size = 0x8, scoped, tag = 'scoped memory for tpu_custom_call.1']
    #allocation5 [shape = 'u8[8192]{0}', space=vmem, size = 0x2000, scoped, tag = 'output window, operand 0']
    %6 = vsyncpa [#allocation3], 0
    %s7 = scalar_lea.sflag [#allocation3], 1
    %8 = vsyncpa %s7, 0
    %9 = vsyncpa [#allocation4], 0
    %s10 = scalar_lea.sflag [#allocation4], 1
    %11 = vsyncpa %s10, 0
    loop: start=0, step=1, limit=4
    $region2: #{tpu_custom_call.1} parent=1 // loop_pre_header
      _
    $region3: #{tpu_custom_call.1} parent=1 // loop_header
      %s13 = sphi 0, %s17
      %p14 = scmp.ge.s32.totalorder %s13, 4
      %s23 = sphi 0, %s25
      %s26 = sphi 0, %s23
      %s27 = sphi 0, %s26
      %s43 = sphi 0, %s27
      %s49 = sphi 0, %s51
      %s52 = sphi 0, %s49
      %s53 = sphi 0, %s52
      %s69 = sphi 0, %s53
    $region4: #{tpu_custom_call.1} parent=1 // loop_header_branch
      %16 = sbr.rel (%p14) target = $region8
    $region5: #{tpu_custom_call.1} parent=1 // loop_body
      %s18 = ssub.s32 %s13, 1
      %s19 = ssub.s32 %s13, 2
      %s20 = sadd.s32 %s13, 1
      %s21 = ssub.s32 %s13, %s20
      %p22 = scmp.eq.s32.totalorder %s21, 0
      %s24 = sadd.s32 %s23, 1
      %s25 = scalar_select %p22, %s23, %s24
      %p28 = pneg %p22
      %p29 = scmp.eq.s32.totalorder %s13, 1
      %p30 = por %p28, %p29
      %p31 = scmp.ne.s32.totalorder %s23, %s26
      %p32 = scmp.eq.s32.totalorder %s13, 0
      %p33 = por %p31, %p32
      %p34 = scmp.ne.s32.totalorder %s23, %s26
      %p35 = scmp.eq.s32.totalorder %s18, 1
      %p36 = por %p34, %p35
      %p37 = scmp.ne.s32.totalorder %s26, %s27
      %p38 = scmp.eq.s32.totalorder %s18, 0
      %p39 = por %p37, %p38
      %p40 = scmp.ne.s32.totalorder %s26, %s27
      %p41 = scmp.eq.s32.totalorder %s19, 1
      %p42 = por %p40, %p41
      %p44 = scmp.ne.s32.totalorder %s27, %s43
      %p45 = scmp.eq.s32.totalorder %s19, 0
      %p46 = por %p44, %p45
      %s47 = ssub.s32 %s13, %s20
      %p48 = scmp.eq.s32.totalorder %s47, 0
      %s50 = sadd.s32 %s49, 1
      %s51 = scalar_select %p48, %s49, %s50
      %p54 = pneg %p48
      %p55 = scmp.eq.s32.totalorder %s13, 1
      %p56 = por %p54, %p55
      %p57 = scmp.ne.s32.totalorder %s49, %s52
      %p58 = scmp.eq.s32.totalorder %s13, 0
      %p59 = por %p57, %p58
      %p60 = scmp.ne.s32.totalorder %s49, %s52
      %p61 = scmp.eq.s32.totalorder %s18, 1
      %p62 = por %p60, %p61
      %p63 = scmp.ne.s32.totalorder %s52, %s53
      %p64 = scmp.eq.s32.totalorder %s18, 0
      %p65 = por %p63, %p64
      %p66 = scmp.ne.s32.totalorder %s52, %s53
      %p67 = scmp.eq.s32.totalorder %s19, 1
      %p68 = por %p66, %p67
      %p70 = scmp.ne.s32.totalorder %s53, %s69
      %p71 = scmp.eq.s32.totalorder %s19, 0
      %p72 = por %p70, %p71
      %p73 = scmp.le.s32.totalorder 1, %s13
      %p74 = scmp.lt.s32.totalorder %s13, 3
      %p75 = pnand %p73, %p74
      %p76 = pneg %p75
      // Predicated region
      $region9: #{tpu_custom_call.1} parent=5 // pred_check
        _
      $region10: #{tpu_custom_call.1} parent=5 // pred_check_branch
        %78 = sbr.rel (%p75) target = $region12
      $region11: #{tpu_custom_call.1} parent=5 // pred_region
        %s79 = ssub.s32 %s13, 1
      $region12: #{tpu_custom_call.1} parent=5 // pred_fallthru
        _
      %p80 = scmp.lt.s32.totalorder %s13, 2
      // Predicated region
      $region13: #{tpu_custom_call.1} parent=5 // pred_check
        %p81 = pneg %p80
      $region14: #{tpu_custom_call.1} parent=5 // pred_check_branch
        %83 = sbr.rel (%p81) target = $region16
      $region15: #{tpu_custom_call.1} parent=5 // pred_region
        // Predicated region
        $region17: #{tpu_custom_call.1} parent=15 // pred_check
          %p84 = pneg %p33
        $region18: #{tpu_custom_call.1} parent=15 // pred_check_branch
          %86 = sbr.rel (%p84) target = $region20
        $region19: #{tpu_custom_call.1} parent=15 // pred_region
          %s87 = sand.u32 %s23, 1
          %s88 = scalar_lea.sflag [#allocation3], %s87
          %s89 = sand.u32 %s23, 1
          %s90 = smul.addr %s89, 8
          %s91 = scalar_lea.vmem [#allocation2], %s90
          %93 = vsyncadd %s88, 0
          %s94 = smul.addr %s13, 8
          %s95 = scalar_lea.hbm %s0, %s94
          %s97 = sshll.u32 %s95, 4
          %s98 = int_to_ptr.hbm [resolvable:$true] %s97
          %s99 = sshll.u32 %s91, 4
          %s100 = int_to_ptr.vmem [resolvable:$true] %s99
          %102 = dma.hbm_to_vmem [thread:$0]  %s98, 128, %s100, %s88
        $region20: #{tpu_custom_call.1} parent=15 // pred_fallthru
          _
      $region16: #{tpu_custom_call.1} parent=5 // pred_fallthru
        _
      %p103 = scmp.le.s32.totalorder 1, %s13
      %p104 = scmp.lt.s32.totalorder %s13, 3
      %p105 = pnand %p103, %p104
      %p106 = pneg %p105
      // Predicated region
      $region21: #{tpu_custom_call.1} parent=5 // pred_check
        _
      $region22: #{tpu_custom_call.1} parent=5 // pred_check_branch
        %108 = sbr.rel (%p105) target = $region24
      $region23: #{tpu_custom_call.1} parent=5 // pred_region
        %s109 = ssub.s32 %s13, 1
        %s110 = sand.u32 %s26, 1
        %s111 = scalar_lea.sflag [#allocation3], %s110
        %s112 = sand.u32 %s26, 1
        %s113 = smul.addr %s112, 8
        %s114 = scalar_lea.vmem [#allocation2], %s113
        // Predicated region
        $region25: #{tpu_custom_call.1} parent=23 // pred_check
          %p115 = pneg %p39
        $region26: #{tpu_custom_call.1} parent=23 // pred_check_branch
          %117 = sbr.rel (%p115) target = $region28
        $region27: #{tpu_custom_call.1} parent=23 // pred_region
          %119 = dma.done %s111, 128
        $region28: #{tpu_custom_call.1} parent=23 // pred_fallthru
          _
        %s120 = sand.u32 %s26, 1
        %s121 = scalar_lea.sflag [#allocation3], %s120
        %s122 = sand.u32 %s26, 1
        %s123 = smul.addr %s122, 8
        %s124 = scalar_lea.vmem [#allocation2], %s123
        %p125 = pneg %p39
        %p126 = pneg %p36
        %p127 = pneg %p65
        %p128 = pneg %p62
        %s129 = sand.u32 %s52, 1
        %s130 = scalar_lea.sflag [#allocation4], %s129
        %s131 = sand.u32 %s52, 1
        %s132 = smul.addr %s131, 8
        %s133 = scalar_lea.vmem [#allocation5], %s132
        %v134 = vlaneseq
        %v135 = vand.u32 %v134, 127
        %vm136 = vcmp.eq.s32.totalorder %v135, 0
        %vm137 = vcmp.lt.s32.totalorder %v135, 10
        %vm138 = vcmp.ge.s32.totalorder %v135, 110
        %v139 = vld [vmem:[%s114] sm:$0xff]
        %140 = vrot.lane.b32.xlu0 %v139, 1
        %v141 = vpop.permute.xlu0 %140
        %v142 = vsel %vm136, 1, 0
        %vm143 = vcmp.eq.s32.totalorder %v142, 1
        %v144 = vsel %vm143, %v139, %v141
        %v145 = vsub.f32 %v139, %v144
        %v146 = vmul.f32 %v145, -0.1
        %v147 = vadd.f32 %v139, %v146
        %148 = vrot.lane.b32.xlu0 %v147, 28
        %v149 = vpop.permute.xlu0 %148
        %150 = vrot.lane.b32.xlu0 %v147, 100
        %v151 = vpop.permute.xlu0 %150
        %v152 = vsel %vm138, 1, 0
        %vm153 = vcmp.eq.s32.totalorder %v152, 1
        %v154 = vsel %vm153, %v151, %v147
        %v155 = vsel %vm137, 1, 0
        %vm156 = vcmp.eq.s32.totalorder %v155, 1
        %v157 = vsel %vm156, %v149, %v154
        %158 = vrot.lane.b32.xlu0 %v157, 1
        %v159 = vpop.permute.xlu0 %158
        %v160 = vsel %vm143, %v157, %v159
        %v161 = vsub.f32 %v157, %v160
        %v162 = vmul.f32 %v161, -0.1
        %v163 = vadd.f32 %v157, %v162
        %164 = vrot.lane.b32.xlu0 %v163, 28
        %v165 = vpop.permute.xlu0 %164
        %166 = vrot.lane.b32.xlu0 %v163, 100
        %v167 = vpop.permute.xlu0 %166
        %v168 = vsel %vm153, %v167, %v163
        %v169 = vsel %vm156, %v165, %v168
        %170 = vrot.lane.b32.xlu0 %v169, 1
        %v171 = vpop.permute.xlu0 %170
        %v172 = vsel %vm143, %v169, %v171
        %v173 = vsub.f32 %v169, %v172
        %v174 = vmul.f32 %v173, -0.1
        %v175 = vadd.f32 %v169, %v174
        %176 = vrot.lane.b32.xlu0 %v175, 28
        %v177 = vpop.permute.xlu0 %176
        %178 = vrot.lane.b32.xlu0 %v175, 100
        %v179 = vpop.permute.xlu0 %178
        %v180 = vsel %vm153, %v179, %v175
        %v181 = vsel %vm156, %v177, %v180
        %182 = vrot.lane.b32.xlu0 %v181, 1
        %v183 = vpop.permute.xlu0 %182
        %v184 = vsel %vm143, %v181, %v183
        %v185 = vsub.f32 %v181, %v184
        %v186 = vmul.f32 %v185, -0.1
        %v187 = vadd.f32 %v181, %v186
        %188 = vrot.lane.b32.xlu0 %v187, 28
        %v189 = vpop.permute.xlu0 %188
        %190 = vrot.lane.b32.xlu0 %v187, 100
        %v191 = vpop.permute.xlu0 %190
        %v192 = vsel %vm153, %v191, %v187
        %v193 = vsel %vm156, %v189, %v192
        %194 = vst [vmem:[%s133] sm:$0xff] %v193
        %s195 = sand.u32 %s52, 1
        %s196 = scalar_lea.sflag [#allocation4], %s195
        %s197 = sand.u32 %s52, 1
        %s198 = smul.addr %s197, 8
        %s199 = scalar_lea.vmem [#allocation5], %s198
        // Predicated region
        $region29: #{tpu_custom_call.1} parent=23 // pred_check
          %p200 = pneg %p62
        $region30: #{tpu_custom_call.1} parent=23 // pred_check_branch
          %202 = sbr.rel (%p200) target = $region32
        $region31: #{tpu_custom_call.1} parent=23 // pred_region
          %204 = vsyncadd %s196, 0
          %s205 = smul.addr %s18, 8
          %s206 = scalar_lea.hbm %s1, %s205
          %s208 = sshll.u32 %s199, 4
          %s209 = int_to_ptr.vmem [resolvable:$true] %s208
          %s210 = sshll.u32 %s206, 4
          %s211 = int_to_ptr.hbm [resolvable:$true] %s210
          %213 = dma.vmem_to_hbm [thread:$0]  %s209, 128, %s211, %s196
        $region32: #{tpu_custom_call.1} parent=23 // pred_fallthru
          _
      $region24: #{tpu_custom_call.1} parent=5 // pred_fallthru
        _
      %p214 = scmp.le.s32.totalorder 2, %s13
      // Predicated region
      $region33: #{tpu_custom_call.1} parent=5 // pred_check
        %p215 = pneg %p214
      $region34: #{tpu_custom_call.1} parent=5 // pred_check_branch
        %217 = sbr.rel (%p215) target = $region36
      $region35: #{tpu_custom_call.1} parent=5 // pred_region
        %s218 = ssub.s32 %s13, 2
        // Predicated region
        $region37: #{tpu_custom_call.1} parent=35 // pred_check
          %p219 = pneg %p68
        $region38: #{tpu_custom_call.1} parent=35 // pred_check_branch
          %221 = sbr.rel (%p219) target = $region40
        $region39: #{tpu_custom_call.1} parent=35 // pred_region
          %s222 = sand.u32 %s53, 1
          %s223 = scalar_lea.sflag [#allocation4], %s222
          %s224 = sand.u32 %s53, 1
          %s225 = smul.addr %s224, 8
          %s226 = scalar_lea.vmem [#allocation5], %s225
          %228 = dma.done %s223, 128
        $region40: #{tpu_custom_call.1} parent=35 // pred_fallthru
          _
      $region36: #{tpu_custom_call.1} parent=5 // pred_fallthru
        _
    $region6: #{tpu_custom_call.1} parent=1 // loop_footer
      %s17 = sadd.s32 1, %s13
    $region7: #{tpu_custom_call.1} parent=1 // loop_footer_branch
      %12 = sbr.rel target = $region3
    $region8: #{tpu_custom_call.1} parent=1 // loop_exit
      _
    %229 = vsyncpa [#allocation3], 1
    %s230 = scalar_lea.sflag [#allocation3], 1
    %231 = vsyncpa %s230, 1
    %232 = vsyncpa [#allocation4], 1
    %s233 = scalar_lea.sflag [#allocation4], 1
    %234 = vsyncpa %s233, 1

</llo_original>
